<compile_context>
chip_gen: v7x
topology: tpu7x:2x2x1
jax: 0.10.0
libtpu: 0.0.40
codegen_flags: <defaults>
</compile_context>

<pallas_src>
import functools

import jax
import jax.numpy as jnp
from jax.experimental import pallas as pl
from jax.experimental.pallas import tpu as pltpu

_VMEM_LIMIT = 32 * 1024 * 1024  # safe on v5e/v6e/v7x


def _pick_tile(m, c, itemsize, max_block_bytes=2 * 1024 * 1024, max_tile=4096):
    """Largest lane tile that is a multiple of 128, divides m, and keeps the
    (1, C, TM) block under max_block_bytes. Falls back to the full dim if m is
    not 128-aligned (block == full array dim is always legal)."""
    if m % 128 != 0:
        return m
    limit = min(max_tile, max(128, max_block_bytes // max(1, c * itemsize)), m)
    best = 128
    cand = 128
    while cand <= limit:
        if m % cand == 0:
            best = cand
        cand += 128
    return best


def _stats_kernel(tid_ref, x_ref, gamma_ref, beta_ref,
                  scale_ref, shift_ref, sum_ref, sq_ref, *, eps, count):
    """Pass 1: accumulate per-channel sum / sumsq; fold into (scale, shift)."""
    n = pl.program_id(0)
    m = pl.program_id(1)
    is_first = jnp.logical_and(n == 0, m == 0)
    is_last = jnp.logical_and(n == pl.num_programs(0) - 1,
                              m == pl.num_programs(1) - 1)

    @pl.when(is_first)
    def _():
        sum_ref[...] = jnp.zeros_like(sum_ref)
        sq_ref[...] = jnp.zeros_like(sq_ref)

    x = x_ref[0].astype(jnp.float32)                      # (C, TM)
    sum_ref[...] += jnp.sum(x, axis=1, keepdims=True)     # (C, 1)
    sq_ref[...] += jnp.sum(x * x, axis=1, keepdims=True)  # (C, 1)

    @pl.when(is_last)
    def _():
        inv_count = 1.0 / float(count)
        mean = sum_ref[...] * inv_count
        var = jnp.maximum(sq_ref[...] * inv_count - mean * mean, 0.0)
        inv_std = jax.lax.rsqrt(var + eps)
        scale = gamma_ref[0] * inv_std                    # (C, 1)
        scale_ref[...] = scale
        shift_ref[...] = beta_ref[0] - mean * scale


def _norm_kernel(x_ref, scale_ref, shift_ref, o_ref):
    """Pass 2: y = x * scale + shift (single FMA per element)."""
    x = x_ref[0].astype(jnp.float32)                      # (C, TM)
    y = x * scale_ref[...] + shift_ref[...]
    o_ref[0] = y.astype(o_ref.dtype)


def multitask_bn_forward(x, gammas, betas, task_id, eps=1e-5):
    """x: (N, C, H, W). gammas/betas: (num_tasks, C). task_id: int (static or traced)."""
    N, C, H, W = x.shape
    M = H * W
    count = N * M

    x3 = x.reshape(N, C, M)                               # free, contiguous
    gammas_r = gammas.astype(jnp.float32).reshape(-1, C, 1)
    betas_r = betas.astype(jnp.float32).reshape(-1, C, 1)
    tid = jnp.asarray(task_id, dtype=jnp.int32).reshape(1)

    TM = _pick_tile(M, C, jnp.dtype(x.dtype).itemsize)
    n_m = M // TM

    # ---- Pass 1: per-channel batch stats, folded into (scale, shift) -------
    scale, shift = pl.pallas_call(
        functools.partial(_stats_kernel, eps=eps, count=count),
        out_shape=(jax.ShapeDtypeStruct((C, 1), jnp.float32),
                   jax.ShapeDtypeStruct((C, 1), jnp.float32)),
        grid_spec=pltpu.PrefetchScalarGridSpec(
            num_scalar_prefetch=1,
            grid=(N, n_m),
            in_specs=[
                pl.BlockSpec((1, C, TM), lambda n, m, tid: (n, 0, m)),
                pl.BlockSpec((1, C, 1), lambda n, m, tid: (tid[0], 0, 0)),
                pl.BlockSpec((1, C, 1), lambda n, m, tid: (tid[0], 0, 0)),
            ],
            out_specs=(pl.BlockSpec((C, 1), lambda n, m, tid: (0, 0)),
                       pl.BlockSpec((C, 1), lambda n, m, tid: (0, 0))),
            scratch_shapes=[pltpu.VMEM((C, 1), jnp.float32),
                            pltpu.VMEM((C, 1), jnp.float32)],
        ),
        compiler_params=pltpu.CompilerParams(
            dimension_semantics=("arbitrary", "arbitrary"),
            vmem_limit_bytes=_VMEM_LIMIT,
        ),
    )(tid, x3, gammas_r, betas_r)

    # ---- Pass 2: normalize (fully independent tiles -> parallel axes) ------
    out3 = pl.pallas_call(
        _norm_kernel,
        out_shape=jax.ShapeDtypeStruct((N, C, M), x.dtype),
        grid=(N, n_m),
        in_specs=[
            pl.BlockSpec((1, C, TM), lambda n, m: (n, 0, m)),
            pl.BlockSpec((C, 1), lambda n, m: (0, 0)),
            pl.BlockSpec((C, 1), lambda n, m: (0, 0)),
        ],
        out_specs=pl.BlockSpec((1, C, TM), lambda n, m: (n, 0, m)),
        compiler_params=pltpu.CompilerParams(
            dimension_semantics=("parallel", "parallel"),
            vmem_limit_bytes=_VMEM_LIMIT,
        ),
    )(x3, scale, shift)

    return out3.reshape(N, C, H, W)


def _reference_bn(x, gamma, beta, eps=1e-5):
    mean = jnp.mean(x, axis=(0, 2, 3), keepdims=True)
    var = jnp.mean((x - mean) ** 2, axis=(0, 2, 3), keepdims=True)
    return (x - mean) / jnp.sqrt(var + eps) * gamma.reshape(1, -1, 1, 1) \
        + beta.reshape(1, -1, 1, 1)


if __name__ == "__main__":
    key = jax.random.PRNGKey(0)
    N, C, H, W = 2, 4, 16, 16
    num_tasks = 2  # initial task + one added via add_task()

    kx, _, _ = jax.random.split(key, 3)
    x = jax.random.normal(kx, (N, C, H, W), dtype=jnp.float32)

    # nn.BatchNorm2d(affine=True) default init: weight = 1, bias = 0, per task.
    gammas = jnp.ones((num_tasks, C), dtype=jnp.float32)
    betas = jnp.zeros((num_tasks, C), dtype=jnp.float32)

    task_id = 0
    out = multitask_bn_forward(x, gammas, betas, task_id)
    out = jax.block_until_ready(out)

    ref = _reference_bn(x, gammas[task_id], betas[task_id])
    assert out.shape == (N, C, H, W)
    assert jnp.allclose(out, ref, atol=1e-5, rtol=1e-5), "mismatch vs reference"

    print("KERNEL_OK")
</pallas_src>

<mosaic_0001>
module attributes {stable_mosaic.version = 11 : i64} {
  func.func @_stats_kernel(%arg0: i32, %arg1: i32, %arg2: memref<1xi32, #tpu.memory_space<smem>>, %arg3: memref<1x4x256xf32, #tpu.memory_space<vmem>>, %arg4: memref<1x4x1xf32, #tpu.memory_space<vmem>>, %arg5: memref<1x4x1xf32, #tpu.memory_space<vmem>>, %arg6: memref<4x1xf32, #tpu.memory_space<vmem>>, %arg7: memref<4x1xf32, #tpu.memory_space<vmem>>, %arg8: memref<4x1xf32, #tpu.memory_space<vmem>>, %arg9: memref<4x1xf32, #tpu.memory_space<vmem>>) attributes {dimension_semantics = [#tpu.dimension_semantics<arbitrary>, #tpu.dimension_semantics<arbitrary>], iteration_bounds = array<i64: 2, 1>, scalar_prefetch = 1 : i64, scratch_operands = 2 : i64, tpu.core_type = #tpu.core_type<tc>, window_params = [{transform_indices = @transform_0, window_bounds = array<i64: 1, 4, 256>}, {transform_indices = @transform_1, window_bounds = array<i64: 1, 4, 1>}, {transform_indices = @transform_2, window_bounds = array<i64: 1, 4, 1>}, {pipeline_mode = #tpu.pipeline_mode<synchronous>, transform_indices = @transform_3, window_bounds = array<i64: 4, 1>}, {pipeline_mode = #tpu.pipeline_mode<synchronous>, transform_indices = @transform_4, window_bounds = array<i64: 4, 1>}]} {
    %c0_i32 = arith.constant 0 : i32
    %0 = arith.cmpi eq, %arg0, %c0_i32 : i32
    %c0_i32_0 = arith.constant 0 : i32
    %1 = arith.cmpi eq, %arg1, %c0_i32_0 : i32
    %2 = arith.andi %0, %1 : i1
    %c1_i32 = arith.constant 1 : i32
    %3 = arith.cmpi eq, %arg0, %c1_i32 : i32
    %c0_i32_1 = arith.constant 0 : i32
    %4 = arith.cmpi eq, %arg1, %c0_i32_1 : i32
    %5 = arith.andi %3, %4 : i1
    %6 = arith.extui %2 : i1 to i32
    %c0_i32_2 = arith.constant 0 : i32
    %7 = arith.cmpi ne, %6, %c0_i32_2 : i32
    scf.if %7 {
      %cst_15 = arith.constant 0.000000e+00 : f32
      %23 = vector.broadcast %cst_15 : f32 to vector<4x1xf32>
      %c0_16 = arith.constant 0 : index
      %c0_17 = arith.constant 0 : index
      %24 = vector.load %arg8[%c0_16, %c0_17] : memref<4x1xf32, #tpu.memory_space<vmem>>, vector<4x1xf32>
      tpu.vector_store %arg8[%c0_16, %c0_17], %23 {strides = array<i32>} : memref<4x1xf32, #tpu.memory_space<vmem>>, vector<4x1xf32>,
      %cst_18 = arith.constant 0.000000e+00 : f32
      %25 = vector.broadcast %cst_18 : f32 to vector<4x1xf32>
      %c0_19 = arith.constant 0 : index
      %c0_20 = arith.constant 0 : index
      %26 = vector.load %arg9[%c0_19, %c0_20] : memref<4x1xf32, #tpu.memory_space<vmem>>, vector<4x1xf32>
      tpu.vector_store %arg9[%c0_19, %c0_20], %25 {strides = array<i32>} : memref<4x1xf32, #tpu.memory_space<vmem>>, vector<4x1xf32>,
    } else {
    }
    %c0 = arith.constant 0 : index
    %c0_3 = arith.constant 0 : index
    %c0_4 = arith.constant 0 : index
    %8 = vector.load %arg3[%c0, %c0_3, %c0_4] : memref<1x4x256xf32, #tpu.memory_space<vmem>>, vector<1x4x256xf32>
    %9 = vector.shape_cast %8 : vector<1x4x256xf32> to vector<4x256xf32>
    %c0_5 = arith.constant 0 : index
    %c0_6 = arith.constant 0 : index
    %10 = vector.load %arg8[%c0_5, %c0_6] : memref<4x1xf32, #tpu.memory_space<vmem>>, vector<4x1xf32>
    %cst = arith.constant dense<0.000000e+00> : vector<4xf32>
    %11 = vector.multi_reduction <add>, %9, %cst [1] : vector<4x256xf32> to vector<4xf32>
    %12 = vector.shape_cast %11 : vector<4xf32> to vector<4x1xf32>
    %13 = arith.addf %10, %12 : vector<4x1xf32>
    %c0_7 = arith.constant 0 : index
    %c0_8 = arith.constant 0 : index
    %14 = vector.load %arg8[%c0_7, %c0_8] : memref<4x1xf32, #tpu.memory_space<vmem>>, vector<4x1xf32>
    tpu.vector_store %arg8[%c0_7, %c0_8], %13 {strides = array<i32>} : memref<4x1xf32, #tpu.memory_space<vmem>>, vector<4x1xf32>,
    %c0_9 = arith.constant 0 : index
    %c0_10 = arith.constant 0 : index
    %15 = vector.load %arg9[%c0_9, %c0_10] : memref<4x1xf32, #tpu.memory_space<vmem>>, vector<4x1xf32>
    %16 = arith.mulf %9, %9 : vector<4x256xf32>
    %cst_11 = arith.constant dense<0.000000e+00> : vector<4xf32>
    %17 = vector.multi_reduction <add>, %16, %cst_11 [1] : vector<4x256xf32> to vector<4xf32>
    %18 = vector.shape_cast %17 : vector<4xf32> to vector<4x1xf32>
    %19 = arith.addf %15, %18 : vector<4x1xf32>
    %c0_12 = arith.constant 0 : index
    %c0_13 = arith.constant 0 : index
    %20 = vector.load %arg9[%c0_12, %c0_13] : memref<4x1xf32, #tpu.memory_space<vmem>>, vector<4x1xf32>
    tpu.vector_store %arg9[%c0_12, %c0_13], %19 {strides = array<i32>} : memref<4x1xf32, #tpu.memory_space<vmem>>, vector<4x1xf32>,
    %21 = arith.extui %5 : i1 to i32
    %c0_i32_14 = arith.constant 0 : i32
    %22 = arith.cmpi ne, %21, %c0_i32_14 : i32
    scf.if %22 {
      %c0_15 = arith.constant 0 : index
      %c0_16 = arith.constant 0 : index
      %23 = vector.load %arg8[%c0_15, %c0_16] : memref<4x1xf32, #tpu.memory_space<vmem>>, vector<4x1xf32>
      %cst_17 = arith.constant 0.001953125 : f32
      %24 = vector.broadcast %cst_17 : f32 to vector<4x1xf32>
      %25 = arith.mulf %23, %24 : vector<4x1xf32>
      %c0_18 = arith.constant 0 : index
      %c0_19 = arith.constant 0 : index
      %26 = vector.load %arg9[%c0_18, %c0_19] : memref<4x1xf32, #tpu.memory_space<vmem>>, vector<4x1xf32>
      %cst_20 = arith.constant 0.001953125 : f32
      %27 = vector.broadcast %cst_20 : f32 to vector<4x1xf32>
      %28 = arith.mulf %26, %27 : vector<4x1xf32>
      %29 = arith.mulf %25, %25 : vector<4x1xf32>
      %30 = arith.subf %28, %29 : vector<4x1xf32>
      %cst_21 = arith.constant 0.000000e+00 : f32
      %31 = vector.broadcast %cst_21 : f32 to vector<4x1xf32>
      %32 = arith.maximumf %30, %31 : vector<4x1xf32>
      %cst_22 = arith.constant 9.99999974E-6 : f32
      %33 = vector.broadcast %cst_22 : f32 to vector<4x1xf32>
      %34 = arith.addf %32, %33 : vector<4x1xf32>
      %35 = math.rsqrt %34 : vector<4x1xf32>
      %c0_23 = arith.constant 0 : index
      %c0_24 = arith.constant 0 : index
      %c0_25 = arith.constant 0 : index
      %36 = vector.load %arg4[%c0_23, %c0_24, %c0_25] : memref<1x4x1xf32, #tpu.memory_space<vmem>>, vector<1x4x1xf32>
      %37 = vector.shape_cast %36 : vector<1x4x1xf32> to vector<4x1xf32>
      %38 = arith.mulf %37, %35 : vector<4x1xf32>
      %c0_26 = arith.constant 0 : index
      %c0_27 = arith.constant 0 : index
      %39 = vector.load %arg6[%c0_26, %c0_27] : memref<4x1xf32, #tpu.memory_space<vmem>>, vector<4x1xf32>
      tpu.vector_store %arg6[%c0_26, %c0_27], %38 {strides = array<i32>} : memref<4x1xf32, #tpu.memory_space<vmem>>, vector<4x1xf32>,
      %c0_28 = arith.constant 0 : index
      %c0_29 = arith.constant 0 : index
      %c0_30 = arith.constant 0 : index
      %40 = vector.load %arg5[%c0_28, %c0_29, %c0_30] : memref<1x4x1xf32, #tpu.memory_space<vmem>>, vector<1x4x1xf32>
      %41 = vector.shape_cast %40 : vector<1x4x1xf32> to vector<4x1xf32>
      %42 = arith.mulf %25, %38 : vector<4x1xf32>
      %43 = arith.subf %41, %42 : vector<4x1xf32>
      %c0_31 = arith.constant 0 : index
      %c0_32 = arith.constant 0 : index
      %44 = vector.load %arg7[%c0_31, %c0_32] : memref<4x1xf32, #tpu.memory_space<vmem>>, vector<4x1xf32>
      tpu.vector_store %arg7[%c0_31, %c0_32], %43 {strides = array<i32>} : memref<4x1xf32, #tpu.memory_space<vmem>>, vector<4x1xf32>,
    } else {
    }
    return
  }
  func.func @transform_0(%arg0: i32, %arg1: i32, %arg2: memref<1xi32, #tpu.memory_space<smem>>) -> (i32, i32, i32) {
    %c0_i32 = arith.constant 0 : i32
    %c0_i32_0 = arith.constant 0 : i32
    return %arg0, %c0_i32, %arg1 : i32, i32, i32
  }
  func.func @transform_1(%arg0: i32, %arg1: i32, %arg2: memref<1xi32, #tpu.memory_space<smem>>) -> (i32, i32, i32) {
    %c0 = arith.constant 0 : index
    %0 = memref.load %arg2[%c0] : memref<1xi32, #tpu.memory_space<smem>>
    %c0_i32 = arith.constant 0 : i32
    %c0_i32_0 = arith.constant 0 : i32
    %c0_i32_1 = arith.constant 0 : i32
    return %0, %c0_i32, %c0_i32_0 : i32, i32, i32
  }
  func.func @transform_2(%arg0: i32, %arg1: i32, %arg2: memref<1xi32, #tpu.memory_space<smem>>) -> (i32, i32, i32) {
    %c0 = arith.constant 0 : index
    %0 = memref.load %arg2[%c0] : memref<1xi32, #tpu.memory_space<smem>>
    %c0_i32 = arith.constant 0 : i32
    %c0_i32_0 = arith.constant 0 : i32
    %c0_i32_1 = arith.constant 0 : i32
    return %0, %c0_i32, %c0_i32_0 : i32, i32, i32
  }
  func.func @transform_3(%arg0: i32, %arg1: i32, %arg2: memref<1xi32, #tpu.memory_space<smem>>) -> (i32, i32) {
    %c0_i32 = arith.constant 0 : i32
    %c0_i32_0 = arith.constant 0 : i32
    %c0_i32_1 = arith.constant 0 : i32
    return %c0_i32, %c0_i32_0 : i32, i32
  }
  func.func @transform_4(%arg0: i32, %arg1: i32, %arg2: memref<1xi32, #tpu.memory_space<smem>>) -> (i32, i32) {
    %c0_i32 = arith.constant 0 : i32
    %c0_i32_0 = arith.constant 0 : i32
    %c0_i32_1 = arith.constant 0 : i32
    return %c0_i32, %c0_i32_0 : i32, i32
  }
}

</mosaic_0001>

<llo_original>
// kernel: tpu_custom_call.1
$region0: #{tpu_custom_call.1}
  #allocation0 [shape = 'u32[]', space=smem, size = 0x4, offset = 0x4, fixed_abs, tag = 'smem constant byte address 0x4 - core index']
  #allocation1 [shape = 'u32[144,128]{1,0:T(1,128)}', space=vmem, size = 0x12000, scoped, tag = 'internal scratch']
  #allocation2 [shape = 'f32[4,1]{1,0:T(4,128)}', space=vmem, size = 0x800, scoped, tag = 'scratch operand']
  #allocation3 [shape = 'f32[4,1]{1,0:T(4,128)}', space=vmem, size = 0x800, scoped, tag = 'scratch operand']
  #allocation4 [shape = 's32[1]{0}', space=sflag, size = 0x4, scoped, tag = 'scoped memory for tpu_custom_call.1']
  #allocation5 [shape = 's32[1]{0:T(128)S(6)}', space=smem, size = 0x200, scoped, tag = 'prefetched SMEM operand 0']
  %s0 = inlined_call_operand.<no memory space> [shape: s32[1], index: 0, kind: input, shape index: {}]
  %s1 = inlined_call_operand.vmem [shape: f32[2,4,256], index: 1, kind: input, shape index: {}]
  %s2 = inlined_call_operand.vmem [shape: f32[2,4,1], index: 2, kind: input, shape index: {}]
  %s3 = inlined_call_operand.vmem [shape: f32[2,4,1], index: 3, kind: input, shape index: {}]
  %s4 = inlined_call_operand.vmem [shape: f32[4,1], index: 4, kind: output, shape index: {0}]
  %s5 = inlined_call_operand.vmem [shape: f32[4,1], index: 5, kind: output, shape index: {1}]
  %6 = xla_tuple %s4, %s5
  %s7 = sld [smem:[#allocation0]]
  $region61: #{tpu_custom_call.1} parent=0
    _
  %s9 = ssub.s32 1, %s7
  %s10 = scalar_select 0, %s9, %s7
  %11 = sst [smem:[#allocation5]] %s0
  loop: start=0, step=1, limit=4
  $region2: #{tpu_custom_call.1} parent=0 // loop_pre_header
    _
  $region3: #{tpu_custom_call.1} parent=0 // loop_header
    %s13 = sphi 0, %s17
    %p14 = scmp.ge.s32.totalorder %s13, 4
    %s20 = sphi 0, %s32
    %s21 = sphi 0, %s28
    %s22 = sphi 0, %s20
    %s23 = sphi 0, %s21
    %s24 = sphi 0, %s22
    %s25 = sphi 0, %s23
    %s37 = sphi 0, %s39
    %s40 = sphi 0, %s37
    %s41 = sphi 0, %s40
    %s57 = sphi 0, %s41
    %s65 = sphi 0, %s67
    %s68 = sphi 0, %s65
    %s69 = sphi 0, %s68
    %s85 = sphi 0, %s69
    %s93 = sphi 0, %s95
    %s96 = sphi 0, %s93
    %s97 = sphi 0, %s96
    %s113 = sphi 0, %s97
    %s117 = sphi 0, %s117
    %s119 = sphi 0, %s117
    %s120 = sphi 0, %s119
    %s134 = sphi 0, %s120
    %s138 = sphi 0, %s138
    %s140 = sphi 0, %s138
    %s141 = sphi 0, %s140
    %s155 = sphi 0, %s141
  $region4: #{tpu_custom_call.1} parent=0 // loop_header_branch
    %16 = sbr.rel (%p14) target = $region8
  $region5: #{tpu_custom_call.1} parent=0 // loop_body
    %s18 = ssub.s32 %s13, 1
    %s19 = ssub.s32 %s13, 2
    %s26 = sadd.s32 1, %s21
    %p27 = scmp.ge.s32.totalorder %s26, 1
    %s28 = scalar_select %p27, 0, %s26
    %s29 = sadd.s32 1, %s20
    %s30 = scalar_select %p27, %s29, %s20
    %p31 = scmp.ge.s32.totalorder %s30, 2
    %s32 = scalar_select %p31, 0, %s30
    %s33 = ssub.s32 %s20, %s32
    %s34 = ssub.s32 %s21, %s28
    %s35 = sor.u32 %s33, %s34
    %p36 = scmp.eq.s32.totalorder %s35, 0
    %s38 = sadd.s32 %s37, 1
    %s39 = scalar_select %p36, %s37, %s38
    %p42 = pneg %p36
    %p43 = scmp.eq.s32.totalorder %s13, 1
    %p44 = por %p42, %p43
    %p45 = scmp.ne.s32.totalorder %s37, %s40
    %p46 = scmp.eq.s32.totalorder %s13, 0
    %p47 = por %p45, %p46
    %p48 = scmp.ne.s32.totalorder %s37, %s40
    %p49 = scmp.eq.s32.totalorder %s18, 1
    %p50 = por %p48, %p49
    %p51 = scmp.ne.s32.totalorder %s40, %s41
    %p52 = scmp.eq.s32.totalorder %s18, 0
    %p53 = por %p51, %p52
    %p54 = scmp.ne.s32.totalorder %s40, %s41
    %p55 = scmp.eq.s32.totalorder %s19, 1
    %p56 = por %p54, %p55
    %p58 = scmp.ne.s32.totalorder %s41, %s57
    %p59 = scmp.eq.s32.totalorder %s19, 0
    %p60 = por %p58, %p59
    %s61 = sld [smem:[#allocation5]]
    %s62 = sld [smem:[#allocation5]]
    %s63 = ssub.s32 %s61, %s62
    %p64 = scmp.eq.s32.totalorder %s63, 0
    %s66 = sadd.s32 %s65, 1
    %s67 = scalar_select %p64, %s65, %s66
    %p70 = pneg %p64
    %p71 = scmp.eq.s32.totalorder %s13, 1
    %p72 = por %p70, %p71
    %p73 = scmp.ne.s32.totalorder %s65, %s68
    %p74 = scmp.eq.s32.totalorder %s13, 0
    %p75 = por %p73, %p74
    %p76 = scmp.ne.s32.totalorder %s65, %s68
    %p77 = scmp.eq.s32.totalorder %s18, 1
    %p78 = por %p76, %p77
    %p79 = scmp.ne.s32.totalorder %s68, %s69
    %p80 = scmp.eq.s32.totalorder %s18, 0
    %p81 = por %p79, %p80
    %p82 = scmp.ne.s32.totalorder %s68, %s69
    %p83 = scmp.eq.s32.totalorder %s19, 1
    %p84 = por %p82, %p83
    %p86 = scmp.ne.s32.totalorder %s69, %s85
    %p87 = scmp.eq.s32.totalorder %s19, 0
    %p88 = por %p86, %p87
    %s89 = sld [smem:[#allocation5]]
    %s90 = sld [smem:[#allocation5]]
    %s91 = ssub.s32 %s89, %s90
    %p92 = scmp.eq.s32.totalorder %s91, 0
    %s94 = sadd.s32 %s93, 1
    %s95 = scalar_select %p92, %s93, %s94
    %p98 = pneg %p92
    %p99 = scmp.eq.s32.totalorder %s13, 1
    %p100 = por %p98, %p99
    %p101 = scmp.ne.s32.totalorder %s93, %s96
    %p102 = scmp.eq.s32.totalorder %s13, 0
    %p103 = por %p101, %p102
    %p104 = scmp.ne.s32.totalorder %s93, %s96
    %p105 = scmp.eq.s32.totalorder %s18, 1
    %p106 = por %p104, %p105
    %p107 = scmp.ne.s32.totalorder %s96, %s97
    %p108 = scmp.eq.s32.totalorder %s18, 0
    %p109 = por %p107, %p108
    %p110 = scmp.ne.s32.totalorder %s96, %s97
    %p111 = scmp.eq.s32.totalorder %s19, 1
    %p112 = por %p110, %p111
    %p114 = scmp.ne.s32.totalorder %s97, %s113
    %p115 = scmp.eq.s32.totalorder %s19, 0
    %p116 = por %p114, %p115
    %s118 = sadd.s32 %s117, 1
    %p121 = scmp.eq.s32.totalorder %s13, 1
    %p122 = scmp.ne.s32.totalorder %s117, %s119
    %p123 = scmp.eq.s32.totalorder %s13, 0
    %p124 = por %p122, %p123
    %p125 = scmp.ne.s32.totalorder %s117, %s119
    %p126 = scmp.eq.s32.totalorder %s18, 1
    %p127 = por %p125, %p126
    %p128 = scmp.ne.s32.totalorder %s119, %s120
    %p129 = scmp.eq.s32.totalorder %s18, 0
    %p130 = por %p128, %p129
    %p131 = scmp.ne.s32.totalorder %s119, %s120
    %p132 = scmp.eq.s32.totalorder %s19, 1
    %p133 = por %p131, %p132
    %p135 = scmp.ne.s32.totalorder %s120, %s134
    %p136 = scmp.eq.s32.totalorder %s19, 0
    %p137 = por %p135, %p136
    %s139 = sadd.s32 %s138, 1
    %p142 = scmp.eq.s32.totalorder %s13, 1
    %p143 = scmp.ne.s32.totalorder %s138, %s140
    %p144 = scmp.eq.s32.totalorder %s13, 0
    %p145 = por %p143, %p144
    %p146 = scmp.ne.s32.totalorder %s138, %s140
    %p147 = scmp.eq.s32.totalorder %s18, 1
    %p148 = por %p146, %p147
    %p149 = scmp.ne.s32.totalorder %s140, %s141
    %p150 = scmp.eq.s32.totalorder %s18, 0
    %p151 = por %p149, %p150
    %p152 = scmp.ne.s32.totalorder %s140, %s141
    %p153 = scmp.eq.s32.totalorder %s19, 1
    %p154 = por %p152, %p153
    %p156 = scmp.ne.s32.totalorder %s141, %s155
    %p157 = scmp.eq.s32.totalorder %s19, 0
    %p158 = por %p156, %p157
    %p159 = scmp.le.s32.totalorder 1, %s13
    %p160 = scmp.lt.s32.totalorder %s13, 3
    %p161 = pnand %p159, %p160
    %p162 = pneg %p161
    // Predicated region
    $region9: #{tpu_custom_call.1} parent=5 // pred_check
      _
    $region10: #{tpu_custom_call.1} parent=5 // pred_check_branch
      %164 = sbr.rel (%p161) target = $region12
    $region11: #{tpu_custom_call.1} parent=5 // pred_region
      %s165 = ssub.s32 %s13, 1
      // Predicated region
      $region13: #{tpu_custom_call.1} parent=11 // pred_check
        %p166 = pneg %p81
      $region14: #{tpu_custom_call.1} parent=11 // pred_check_branch
        %168 = sbr.rel (%p166) target = $region16
      $region15: #{tpu_custom_call.1} parent=11 // pred_region
        %s169 = sld [smem:[#allocation5]]
        %p170 = scmp.lt.s32.totalorder %s169, 1
        %s171 = scalar_select %p170, %s169, 1
        %s172 = smul.addr %s171, 4
        %s173 = scalar_lea.vmem %s2, %s172
        %s174 = sld [smem:[#allocation5]]
      $region16: #{tpu_custom_call.1} parent=11 // pred_fallthru
        _
      // Predicated region
      $region17: #{tpu_custom_call.1} parent=11 // pred_check
        %p175 = pneg %p109
      $region18: #{tpu_custom_call.1} parent=11 // pred_check_branch
        %177 = sbr.rel (%p175) target = $region20
      $region19: #{tpu_custom_call.1} parent=11 // pred_region
        %s178 = sld [smem:[#allocation5]]
        %p179 = scmp.lt.s32.totalorder %s178, 1
        %s180 = scalar_select %p179, %s178, 1
        %s181 = smul.addr %s180, 4
        %s182 = scalar_lea.vmem %s3, %s181
        %s183 = sld [smem:[#allocation5]]
      $region20: #{tpu_custom_call.1} parent=11 // pred_fallthru
        _
    $region12: #{tpu_custom_call.1} parent=5 // pred_fallthru
      _
    %p184 = scmp.lt.s32.totalorder %s13, 2
    // Predicated region
    $region21: #{tpu_custom_call.1} parent=5 // pred_check
      %p185 = pneg %p184
    $region22: #{tpu_custom_call.1} parent=5 // pred_check_branch
      %187 = sbr.rel (%p185) target = $region24
    $region23: #{tpu_custom_call.1} parent=5 // pred_region
      // Predicated region
      $region25: #{tpu_custom_call.1} parent=23 // pred_check
        %p188 = pneg %p47
      $region26: #{tpu_custom_call.1} parent=23 // pred_check_branch
        %190 = sbr.rel (%p188) target = $region28
      $region27: #{tpu_custom_call.1} parent=23 // pred_region
        %s191 = smul.u32 2, %s21
        %p192 = scmp.lt.s32.totalorder %s20, 1
        %s193 = scalar_select %p192, %s20, 1
        %p194 = scmp.lt.s32.totalorder %s191, 1
        %s195 = scalar_select %p194, %s191, 1
        %s196 = smul.addr %s193, 2
        %s197 = sadd.s32 %s195, %s196
        %s198 = smul.addr %s197, 4
        %s199 = scalar_lea.vmem %s1, %s198
        %s200 = smul.u32 2, %s21
      $region28: #{tpu_custom_call.1} parent=23 // pred_fallthru
        _
    $region24: #{tpu_custom_call.1} parent=5 // pred_fallthru
      _
    %p201 = scmp.le.s32.totalorder 1, %s13
    %p202 = scmp.lt.s32.totalorder %s13, 3
    %p203 = pnand %p201, %p202
    %p204 = pneg %p203
    // Predicated region
    $region29: #{tpu_custom_call.1} parent=5 // pred_check
      _
    $region30: #{tpu_custom_call.1} parent=5 // pred_check_branch
      %206 = sbr.rel (%p203) target = $region32
    $region31: #{tpu_custom_call.1} parent=5 // pred_region
      %s207 = ssub.s32 %s13, 1
      %s208 = smul.u32 2, %s23
      %p209 = scmp.lt.s32.totalorder %s22, 1
      %s210 = scalar_select %p209, %s22, 1
      %p211 = scmp.lt.s32.totalorder %s208, 1
      %s212 = scalar_select %p211, %s208, 1
      %s213 = smul.addr %s210, 2
      %s214 = sadd.s32 %s212, %s213
      %s215 = smul.addr %s214, 4
      %s216 = scalar_lea.vmem %s1, %s215
      %p217 = pneg %p53
      %p218 = pneg %p50
      %s219 = sld [smem:[#allocation5]]
      %p220 = scmp.lt.s32.totalorder %s219, 1
      %s221 = scalar_select %p220, %s219, 1
      %s222 = smul.addr %s221, 4
      %s223 = scalar_lea.vmem %s2, %s222
      %p224 = pneg %p81
      %p225 = pneg %p78
      %s226 = sld [smem:[#allocation5]]
      %p227 = scmp.lt.s32.totalorder %s226, 1
      %s228 = scalar_select %p227, %s226, 1
      %s229 = smul.addr %s228, 4
      %s230 = scalar_lea.vmem %s3, %s229
      %p231 = pneg %p109
      %p232 = pneg %p106
      %p233 = pneg %p130
      %p234 = pneg %p127
      %p235 = pneg %p151
      %p236 = pneg %p148
      %s237 = smul.u32 2, %s23
      %p238 = scmp.lt.s32.totalorder %s22, 1
      %s239 = scalar_select %p238, %s22, 1
      %p240 = scmp.lt.s32.totalorder %s237, 1
      %s241 = scalar_select %p240, %s237, 1
      %s242 = smul.addr %s239, 2
      %s243 = sadd.s32 %s241, %s242
      %s244 = smul.addr %s243, 4
      %s245 = scalar_lea.vmem %s1, %s244
      %s246 = smul.u32 2, %s23
      %s247 = sld [smem:[#allocation5]]
      %p248 = scmp.lt.s32.totalorder %s247, 1
      %s249 = scalar_select %p248, %s247, 1
      %s250 = smul.addr %s249, 4
      %s251 = scalar_lea.vmem %s2, %s250
      %s252 = sld [smem:[#allocation5]]
      %s253 = sld [smem:[#allocation5]]
      %p254 = scmp.lt.s32.totalorder %s253, 1
      %s255 = scalar_select %p254, %s253, 1
      %s256 = smul.addr %s255, 4
      %s257 = scalar_lea.vmem %s3, %s256
      %s258 = sld [smem:[#allocation5]]
      %p259 = scmp.eq.s32.totalorder %s22, 0
      %p260 = scmp.eq.s32.totalorder %s23, 0
      %p261 = pnand %p259, %p260
      %p262 = pneg %p261
      %p263 = scmp.eq.s32.totalorder %s22, 1
      %p264 = pnand %p263, %p260
      %p265 = pneg %p264
      // Predicated region
      $region33: #{tpu_custom_call.1} parent=31 // pred_check
        _
      $region34: #{tpu_custom_call.1} parent=31 // pred_check_branch
        %267 = sbr.rel (%p261) target = $region36
      $region35: #{tpu_custom_call.1} parent=31 // pred_region
        %vm268 = vcmask 3072
        %269 = vst.msk [vmem:[#allocation2] sm:$0xf] %vm268, 0.0
        %270 = vst.msk [vmem:[#allocation3] sm:$0xf] %vm268, 0.0
      $region36: #{tpu_custom_call.1} parent=31 // pred_fallthru
        _
      %v271 = vld [vmem:[%s245] sm:$0xff]
      %v272 = vld [vmem:[#allocation2] sm:$0xf]
      %v274 = vcombine.high %v271, %v271
      %vm276 = vcmask 1043456
      %v277 = vsel %vm276, %v271, 0.0
      %v278 = vsel %vm276, %v274, 0.0
      %v279 = vadd.f32 %v277, %v278
      %280 = vadd.xlane.f32.xlu0 %v279
      %v281 = vpop.xlane.xlu0 %280
      %v282 = vadd.f32 %v272, %v281
      %vm283 = vcmask 3072
      %284 = vst.msk [vmem:[#allocation2] sm:$0xf] %vm283, %v282
      %v285 = vld [vmem:[#allocation3] sm:$0xf]
      %v286 = vmul.f32 %v271, %v271
      %v288 = vcombine.high %v286, %v286
      %v290 = vsel %vm276, %v286, 0.0
      %v291 = vsel %vm276, %v288, 0.0
      %v292 = vadd.f32 %v290, %v291
      %293 = vadd.xlane.f32.xlu0 %v292
      %v294 = vpop.xlane.xlu0 %293
      %v295 = vadd.f32 %v285, %v294
      %296 = vst.msk [vmem:[#allocation3] sm:$0xf] %vm283, %v295
      // Predicated region
      $region37: #{tpu_custom_call.1} parent=31 // pred_check
        _
      $region38: #{tpu_custom_call.1} parent=31 // pred_check_branch
        %298 = sbr.rel (%p264) target = $region40
      $region39: #{tpu_custom_call.1} parent=31 // pred_region
        %v299 = vld [vmem:[#allocation2] sm:$0xf]
        %v300 = vmul.f32 %v299, 0.001953125
        %v301 = vld [vmem:[#allocation3] sm:$0xf]
        %v302 = vmul.f32 %v301, 0.001953125
        %v303 = vmul.f32 %v300, %v300
        %v304 = vsub.f32 %v302, %v303
        %v305 = vmax.f32 %v304, 0.0
        %v306 = vadd.f32 %v305, 1e-05
        %v307 = vrsqrt.pop %v306
        %v308 = vld [vmem:[%s251] sm:$0xf]
        %v309 = vmul.f32 %v308, %v307
        %310 = vst.msk [vmem:[%s4] sm:$0xf] %vm283, %v309
        %v311 = vld [vmem:[%s257] sm:$0xf]
        %v312 = vmul.f32 %v300, %v309
        %v313 = vsub.f32 %v311, %v312
        %314 = vst.msk [vmem:[%s5] sm:$0xf] %vm283, %v313
      $region40: #{tpu_custom_call.1} parent=31 // pred_fallthru
        _
      // Predicated region
      $region41: #{tpu_custom_call.1} parent=31 // pred_check
        %p315 = pneg %p127
      $region42: #{tpu_custom_call.1} parent=31 // pred_check_branch
        %317 = sbr.rel (%p315) target = $region44
      $region43: #{tpu_custom_call.1} parent=31 // pred_region
        _
      $region44: #{tpu_custom_call.1} parent=31 // pred_fallthru
        _
      // Predicated region
      $region45: #{tpu_custom_call.1} parent=31 // pred_check
        %p318 = pneg %p148
      $region46: #{tpu_custom_call.1} parent=31 // pred_check_branch
        %320 = sbr.rel (%p318) target = $region48
      $region47: #{tpu_custom_call.1} parent=31 // pred_region
        _
      $region48: #{tpu_custom_call.1} parent=31 // pred_fallthru
        _
      // Predicated region
      $region49: #{tpu_custom_call.1} parent=31 // pred_check
        %p321 = pneg %p127
      $region50: #{tpu_custom_call.1} parent=31 // pred_check_branch
        %323 = sbr.rel (%p321) target = $region52
      $region51: #{tpu_custom_call.1} parent=31 // pred_region
        _
      $region52: #{tpu_custom_call.1} parent=31 // pred_fallthru
        _
      // Predicated region
      $region53: #{tpu_custom_call.1} parent=31 // pred_check
        %p324 = pneg %p148
      $region54: #{tpu_custom_call.1} parent=31 // pred_check_branch
        %326 = sbr.rel (%p324) target = $region56
      $region55: #{tpu_custom_call.1} parent=31 // pred_region
        _
      $region56: #{tpu_custom_call.1} parent=31 // pred_fallthru
        _
    $region32: #{tpu_custom_call.1} parent=5 // pred_fallthru
      _
    %p327 = scmp.le.s32.totalorder 2, %s13
    // Predicated region
    $region57: #{tpu_custom_call.1} parent=5 // pred_check
      %p328 = pneg %p327
    $region58: #{tpu_custom_call.1} parent=5 // pred_check_branch
      %330 = sbr.rel (%p328) target = $region60
    $region59: #{tpu_custom_call.1} parent=5 // pred_region
      %s331 = ssub.s32 %s13, 2
    $region60: #{tpu_custom_call.1} parent=5 // pred_fallthru
      _
  $region6: #{tpu_custom_call.1} parent=0 // loop_footer
    %s17 = sadd.s32 1, %s13
  $region7: #{tpu_custom_call.1} parent=0 // loop_footer_branch
    %12 = sbr.rel target = $region3
  $region8: #{tpu_custom_call.1} parent=0 // loop_exit
    _

</llo_original>
